<compile_context>
chip_gen: v7x
topology: tpu7x:2x2x1
jax: 0.10.0
libtpu: 0.0.40
codegen_flags: <defaults>
</compile_context>

<pallas_src>
import functools

import jax
import jax.numpy as jnp
from jax.experimental import pallas as pl
from jax.experimental.pallas import tpu as pltpu


def _kernel_size(out_dim: int) -> int:
    return max(min(int(out_dim / 4), 24), 4)


def _vmem_capacity_bytes() -> int:
    try:
        return int(pltpu.get_tpu_info().vmem_capacity_bytes)
    except Exception:
        return 64 << 20          # conservative fallback (v7x-sized)


def _decomp_kernel(x_ref, res_ref, trend_ref, *, k: int, pad: int):
    """x/res/trend refs: (BT, L, TD). Moving mean as a k-tap shifted VPU sum."""
    bt, L, td = x_ref.shape
    x = x_ref[...].astype(jnp.float32)                        # cast once; f32 accumulation
    front = jnp.broadcast_to(x[:, 0:1, :], (bt, pad, td))     # edge replication built
    end = jnp.broadcast_to(x[:, L - 1:L, :], (bt, pad, td))   # in VMEM only
    xp = jnp.concatenate([front, x, end], axis=1)             # (BT, L + k - 1, TD)
    acc = xp[:, 0:L, :]
    for s in range(1, k):                                      # k <= 24 static taps
        acc = acc + xp[:, s:s + L, :]
    trend = acc * jnp.float32(1.0 / k)
    trend_ref[...] = trend.astype(trend_ref.dtype)
    res_ref[...] = (x - trend).astype(res_ref.dtype)


def _pick_tiles(B: int, L: int, Dp: int, k: int, itemsize: int, budget: int):
    """Choose (BT, TD): batch tile and lane tile sizes within the VMEM budget."""

    def working_set(bt, td):
        blocks = 2 * 3 * bt * L * td * itemsize       # double-buffered in + 2 out blocks
        temps = bt * td * 4 * (4 * L + k)             # f32 temporaries inside the body
        return blocks + temps

    # Lane tile: largest 128-multiple divisor of Dp within budget (lane-dense stores).
    td = 128
    t = 128
    while t <= Dp:
        if Dp % t == 0 and working_set(1, t) <= budget:
            td = t
        t += 128

    # Batch tile: grow over divisors of B within budget; keep >= 2 grid points
    # (so both v7x TensorCores get work) whenever any parallelism exists.
    bt = 1
    for cand in range(1, B + 1):
        if B % cand:
            continue
        if working_set(cand, td) > budget:
            break
        if Dp // td == 1 and B >= 2 and B // cand < 2:
            continue                                   # would collapse to a 1x1 grid
        bt = cand
    return bt, td


def moving_block(x, out_dim):
    """Pallas implementation of MovingBlock.forward. Returns (res, trend)."""
    size = _kernel_size(out_dim)
    pad = (size - 1) // 2
    B, L, D = x.shape
    # Even kernel sizes change the pooled length; the PyTorch module itself fails
    # at `x - moving_mean` there, so only the well-defined odd case is supported.
    assert size % 2 == 1, "even kernel size is ill-defined in the PyTorch reference too"

    # Lane-dense layout: pad D up to a multiple of 128 (zero columns are inert),
    # slice the outputs back afterwards.  Avoids masked vst partial stores.
    Dp = int(pl.cdiv(D, 128)) * 128
    x_in = x if Dp == D else jnp.pad(x, ((0, 0), (0, 0), (0, Dp - D)))

    cap = _vmem_capacity_bytes()
    budget = (3 * cap) // 5                  # ~76 MiB on v5e/v6e, ~38 MiB on v7x
    itemsize = x.dtype.itemsize
    BT, TD = _pick_tiles(B, L, Dp, size, itemsize, budget)

    needed = 2 * 3 * BT * L * TD * itemsize + BT * TD * 4 * (4 * L + size)
    vmem_limit = int(min(cap, max(needed + (8 << 20), 32 << 20)))

    grid = (B // BT, Dp // TD)
    blk = pl.BlockSpec((BT, L, TD), lambda b, d: (b, 0, d))

    kernel = functools.partial(_decomp_kernel, k=size, pad=pad)

    res, trend = pl.pallas_call(
        kernel,
        out_shape=(
            jax.ShapeDtypeStruct((B, L, Dp), x.dtype),
            jax.ShapeDtypeStruct((B, L, Dp), x.dtype),
        ),
        grid=grid,
        in_specs=[blk],
        out_specs=(blk, blk),
        compiler_params=pltpu.CompilerParams(
            dimension_semantics=("parallel", "parallel"),
            vmem_limit_bytes=vmem_limit,
        ),
    )(x_in)

    if Dp != D:
        res = res[:, :, :D]
        trend = trend[:, :, :D]
    return res, trend


def _reference(x, out_dim):
    """Plain-JAX replica of the PyTorch series_decomp for verification."""
    size = _kernel_size(out_dim)
    pad = (size - 1) // 2
    front = jnp.repeat(x[:, 0:1, :], pad, axis=1)
    end = jnp.repeat(x[:, -1:, :], pad, axis=1)
    xp = jnp.concatenate([front, x, end], axis=1)
    L = x.shape[1]
    windows = jnp.stack([xp[:, j:j + L, :] for j in range(size)], axis=0)
    trend = windows.mean(axis=0)
    return x - trend, trend


if __name__ == "__main__":
    # Small shapes consistent with the module's (b, c, h) input.
    B, C, H = 2, 8, 32
    out_dim = 20                                      # -> kernel size 5 (odd)

    key = jax.random.PRNGKey(0)
    x = jax.random.normal(key, (B, C, H), dtype=jnp.float32)

    res, trend = moving_block(x, out_dim)
    res = jax.block_until_ready(res)
    trend = jax.block_until_ready(trend)

    res_ref, trend_ref = _reference(x, out_dim)
    assert res.shape == (B, C, H) and trend.shape == (B, C, H)
    assert jnp.allclose(res, res_ref, rtol=1e-5, atol=1e-5)
    assert jnp.allclose(trend, trend_ref, rtol=1e-5, atol=1e-5)

    print("KERNEL_OK")
</pallas_src>

<mosaic_0001>
module attributes {stable_mosaic.version = 11 : i64} {
  func.func @_decomp_kernel(%arg0: i32, %arg1: i32, %arg2: memref<1x8x128xf32, #tpu.memory_space<vmem>>, %arg3: memref<1x8x128xf32, #tpu.memory_space<vmem>>, %arg4: memref<1x8x128xf32, #tpu.memory_space<vmem>>) attributes {dimension_semantics = [#tpu.dimension_semantics<parallel>, #tpu.dimension_semantics<parallel>], iteration_bounds = array<i64: 2, 1>, scalar_prefetch = 0 : i64, scratch_operands = 0 : i64, tpu.core_type = #tpu.core_type<tc>, window_params = [{transform_indices = @transform_0, window_bounds = array<i64: 1, 8, 128>}, {transform_indices = @transform_1, window_bounds = array<i64: 1, 8, 128>}, {transform_indices = @transform_2, window_bounds = array<i64: 1, 8, 128>}]} {
    %c0 = arith.constant 0 : index
    %c0_0 = arith.constant 0 : index
    %c0_1 = arith.constant 0 : index
    %0 = vector.load %arg2[%c0, %c0_0, %c0_1] : memref<1x8x128xf32, #tpu.memory_space<vmem>>, vector<1x8x128xf32>
    %1 = vector.extract_strided_slice %0 {offsets = [0, 0, 0], sizes = [1, 1, 128], strides = [1, 1, 1]} : vector<1x8x128xf32> to vector<1x1x128xf32>
    %2 = vector.shape_cast %1 : vector<1x1x128xf32> to vector<1x1x128xf32>
    %3 = vector.broadcast %2 : vector<1x1x128xf32> to vector<1x2x128xf32>
    %4 = vector.extract_strided_slice %0 {offsets = [0, 7, 0], sizes = [1, 1, 128], strides = [1, 1, 1]} : vector<1x8x128xf32> to vector<1x1x128xf32>
    %5 = vector.shape_cast %4 : vector<1x1x128xf32> to vector<1x1x128xf32>
    %6 = vector.broadcast %5 : vector<1x1x128xf32> to vector<1x2x128xf32>
    %7 = tpu.concatenate %3, %0, %6 in 1 : vector<1x2x128xf32>, vector<1x8x128xf32>, vector<1x2x128xf32> -> vector<1x12x128xf32>
    %8 = vector.extract_strided_slice %7 {offsets = [0, 0, 0], sizes = [1, 8, 128], strides = [1, 1, 1]} : vector<1x12x128xf32> to vector<1x8x128xf32>
    %9 = vector.extract_strided_slice %7 {offsets = [0, 1, 0], sizes = [1, 8, 128], strides = [1, 1, 1]} : vector<1x12x128xf32> to vector<1x8x128xf32>
    %10 = arith.addf %8, %9 : vector<1x8x128xf32>
    %11 = vector.extract_strided_slice %7 {offsets = [0, 2, 0], sizes = [1, 8, 128], strides = [1, 1, 1]} : vector<1x12x128xf32> to vector<1x8x128xf32>
    %12 = arith.addf %10, %11 : vector<1x8x128xf32>
    %13 = vector.extract_strided_slice %7 {offsets = [0, 3, 0], sizes = [1, 8, 128], strides = [1, 1, 1]} : vector<1x12x128xf32> to vector<1x8x128xf32>
    %14 = arith.addf %12, %13 : vector<1x8x128xf32>
    %15 = vector.extract_strided_slice %7 {offsets = [0, 4, 0], sizes = [1, 8, 128], strides = [1, 1, 1]} : vector<1x12x128xf32> to vector<1x8x128xf32>
    %16 = arith.addf %14, %15 : vector<1x8x128xf32>
    %cst = arith.constant 2.000000e-01 : f32
    %17 = vector.broadcast %cst : f32 to vector<1x8x128xf32>
    %18 = arith.mulf %16, %17 : vector<1x8x128xf32>
    %c0_2 = arith.constant 0 : index
    %c0_3 = arith.constant 0 : index
    %c0_4 = arith.constant 0 : index
    %19 = vector.load %arg4[%c0_2, %c0_3, %c0_4] : memref<1x8x128xf32, #tpu.memory_space<vmem>>, vector<1x8x128xf32>
    tpu.vector_store %arg4[%c0_2, %c0_3, %c0_4], %18 {strides = array<i32>} : memref<1x8x128xf32, #tpu.memory_space<vmem>>, vector<1x8x128xf32>,
    %20 = arith.subf %0, %18 : vector<1x8x128xf32>
    %c0_5 = arith.constant 0 : index
    %c0_6 = arith.constant 0 : index
    %c0_7 = arith.constant 0 : index
    %21 = vector.load %arg3[%c0_5, %c0_6, %c0_7] : memref<1x8x128xf32, #tpu.memory_space<vmem>>, vector<1x8x128xf32>
    tpu.vector_store %arg3[%c0_5, %c0_6, %c0_7], %20 {strides = array<i32>} : memref<1x8x128xf32, #tpu.memory_space<vmem>>, vector<1x8x128xf32>,
    return
  }
  func.func @transform_0(%arg0: i32, %arg1: i32) -> (i32, i32, i32) {
    %c0_i32 = arith.constant 0 : i32
    %c0_i32_0 = arith.constant 0 : i32
    return %arg0, %c0_i32, %arg1 : i32, i32, i32
  }
  func.func @transform_1(%arg0: i32, %arg1: i32) -> (i32, i32, i32) {
    %c0_i32 = arith.constant 0 : i32
    %c0_i32_0 = arith.constant 0 : i32
    return %arg0, %c0_i32, %arg1 : i32, i32, i32
  }
  func.func @transform_2(%arg0: i32, %arg1: i32) -> (i32, i32, i32) {
    %c0_i32 = arith.constant 0 : i32
    %c0_i32_0 = arith.constant 0 : i32
    return %arg0, %c0_i32, %arg1 : i32, i32, i32
  }
}

</mosaic_0001>

<llo_original>
// kernel: tpu_custom_call.1
$region0: #{tpu_custom_call.1}
  #allocation0 [shape = 'u32[]', space=smem, size = 0x4, offset = 0x4, fixed_abs, tag = 'smem constant byte address 0x4 - core index']
  #allocation1 [shape = 'u32[144,128]{1,0:T(1,128)}', space=vmem, size = 0x12000, scoped, tag = 'internal scratch']
  %s0 = inlined_call_operand.hbm [shape: f32[2,8,128], index: 0, kind: input, shape index: {}]
  %s1 = inlined_call_operand.hbm [shape: f32[2,8,128], index: 1, kind: output, shape index: {0}]
  %s2 = inlined_call_operand.hbm [shape: f32[2,8,128], index: 2, kind: output, shape index: {1}]
  %3 = xla_tuple %s1, %s2
  %s4 = sld [smem:[#allocation0]]
  $region49: #{tpu_custom_call.1} parent=0
    _
  %s6 = ssub.s32 1, %s4
  %s7 = scalar_select 0, %s6, %s4
  $region1: #{tpu_custom_call.1} parent=0
    #allocation2 [shape = 'u8[8192]{0}', space=vmem, size = 0x2000, scoped, tag = 'input window, operand 0']
    #allocation3 [shape = 's32[2]{0}', space=sflag, size = 0x8, scoped, tag = 'scoped memory for tpu_custom_call.1']
    #allocation4 [shape = 's32[2]{0}', space=sflag, size = 0x8, scoped, tag = 'scoped memory for tpu_custom_call.1']
    #allocation5 [shape = 'u8[8192]{0}', space=vmem, size = 0x2000, scoped, tag = 'output window, operand 0']
    #allocation6 [shape = 'u8[8192]{0}', space=vmem, size = 0x2000, scoped, tag = 'output window, operand 1']
    #allocation7 [shape = 's32[2]{0}', space=sflag, size = 0x8, scoped, tag = 'scoped memory for tpu_custom_call.1']
    %8 = vsyncpa [#allocation3], 0
    %s9 = scalar_lea.sflag [#allocation3], 1
    %10 = vsyncpa %s9, 0
    %11 = vsyncpa [#allocation4], 0
    %s12 = scalar_lea.sflag [#allocation4], 1
    %13 = vsyncpa %s12, 0
    %14 = vsyncpa [#allocation7], 0
    %s15 = scalar_lea.sflag [#allocation7], 1
    %16 = vsyncpa %s15, 0
    loop: start=0, step=1, limit=4
    $region2: #{tpu_custom_call.1} parent=1 // loop_pre_header
      _
    $region3: #{tpu_custom_call.1} parent=1 // loop_header
      %s18 = sphi 0, %s22
      %p19 = scmp.ge.s32.totalorder %s18, 4
      %s25 = sphi 0, %s37
      %s26 = sphi 0, %s33
      %s27 = sphi 0, %s25
      %s28 = sphi 0, %s26
      %s29 = sphi 0, %s27
      %s30 = sphi 0, %s28
      %s42 = sphi 0, %s44
      %s45 = sphi 0, %s42
      %s46 = sphi 0, %s45
      %s62 = sphi 0, %s46
      %s70 = sphi 0, %s72
      %s73 = sphi 0, %s70
      %s74 = sphi 0, %s73
      %s90 = sphi 0, %s74
      %s98 = sphi 0, %s100
      %s101 = sphi 0, %s98
      %s102 = sphi 0, %s101
      %s118 = sphi 0, %s102
    $region4: #{tpu_custom_call.1} parent=1 // loop_header_branch
      %21 = sbr.rel (%p19) target = $region8
    $region5: #{tpu_custom_call.1} parent=1 // loop_body
      %s23 = ssub.s32 %s18, 1
      %s24 = ssub.s32 %s18, 2
      %s31 = sadd.s32 1, %s26
      %p32 = scmp.ge.s32.totalorder %s31, 1
      %s33 = scalar_select %p32, 0, %s31
      %s34 = sadd.s32 1, %s25
      %s35 = scalar_select %p32, %s34, %s25
      %p36 = scmp.ge.s32.totalorder %s35, 2
      %s37 = scalar_select %p36, 0, %s35
      %s38 = ssub.s32 %s25, %s37
      %s39 = ssub.s32 %s26, %s33
      %s40 = sor.u32 %s38, %s39
      %p41 = scmp.eq.s32.totalorder %s40, 0
      %s43 = sadd.s32 %s42, 1
      %s44 = scalar_select %p41, %s42, %s43
      %p47 = pneg %p41
      %p48 = scmp.eq.s32.totalorder %s18, 1
      %p49 = por %p47, %p48
      %p50 = scmp.ne.s32.totalorder %s42, %s45
      %p51 = scmp.eq.s32.totalorder %s18, 0
      %p52 = por %p50, %p51
      %p53 = scmp.ne.s32.totalorder %s42, %s45
      %p54 = scmp.eq.s32.totalorder %s23, 1
      %p55 = por %p53, %p54
      %p56 = scmp.ne.s32.totalorder %s45, %s46
      %p57 = scmp.eq.s32.totalorder %s23, 0
      %p58 = por %p56, %p57
      %p59 = scmp.ne.s32.totalorder %s45, %s46
      %p60 = scmp.eq.s32.totalorder %s24, 1
      %p61 = por %p59, %p60
      %p63 = scmp.ne.s32.totalorder %s46, %s62
      %p64 = scmp.eq.s32.totalorder %s24, 0
      %p65 = por %p63, %p64
      %s66 = ssub.s32 %s25, %s37
      %s67 = ssub.s32 %s26, %s33
      %s68 = sor.u32 %s66, %s67
      %p69 = scmp.eq.s32.totalorder %s68, 0
      %s71 = sadd.s32 %s70, 1
      %s72 = scalar_select %p69, %s70, %s71
      %p75 = pneg %p69
      %p76 = scmp.eq.s32.totalorder %s18, 1
      %p77 = por %p75, %p76
      %p78 = scmp.ne.s32.totalorder %s70, %s73
      %p79 = scmp.eq.s32.totalorder %s18, 0
      %p80 = por %p78, %p79
      %p81 = scmp.ne.s32.totalorder %s70, %s73
      %p82 = scmp.eq.s32.totalorder %s23, 1
      %p83 = por %p81, %p82
      %p84 = scmp.ne.s32.totalorder %s73, %s74
      %p85 = scmp.eq.s32.totalorder %s23, 0
      %p86 = por %p84, %p85
      %p87 = scmp.ne.s32.totalorder %s73, %s74
      %p88 = scmp.eq.s32.totalorder %s24, 1
      %p89 = por %p87, %p88
      %p91 = scmp.ne.s32.totalorder %s74, %s90
      %p92 = scmp.eq.s32.totalorder %s24, 0
      %p93 = por %p91, %p92
      %s94 = ssub.s32 %s25, %s37
      %s95 = ssub.s32 %s26, %s33
      %s96 = sor.u32 %s94, %s95
      %p97 = scmp.eq.s32.totalorder %s96, 0
      %s99 = sadd.s32 %s98, 1
      %s100 = scalar_select %p97, %s98, %s99
      %p103 = pneg %p97
      %p104 = scmp.eq.s32.totalorder %s18, 1
      %p105 = por %p103, %p104
      %p106 = scmp.ne.s32.totalorder %s98, %s101
      %p107 = scmp.eq.s32.totalorder %s18, 0
      %p108 = por %p106, %p107
      %p109 = scmp.ne.s32.totalorder %s98, %s101
      %p110 = scmp.eq.s32.totalorder %s23, 1
      %p111 = por %p109, %p110
      %p112 = scmp.ne.s32.totalorder %s101, %s102
      %p113 = scmp.eq.s32.totalorder %s23, 0
      %p114 = por %p112, %p113
      %p115 = scmp.ne.s32.totalorder %s101, %s102
      %p116 = scmp.eq.s32.totalorder %s24, 1
      %p117 = por %p115, %p116
      %p119 = scmp.ne.s32.totalorder %s102, %s118
      %p120 = scmp.eq.s32.totalorder %s24, 0
      %p121 = por %p119, %p120
      %p122 = scmp.le.s32.totalorder 1, %s18
      %p123 = scmp.lt.s32.totalorder %s18, 3
      %p124 = pnand %p122, %p123
      %p125 = pneg %p124
      // Predicated region
      $region9: #{tpu_custom_call.1} parent=5 // pred_check
        _
      $region10: #{tpu_custom_call.1} parent=5 // pred_check_branch
        %127 = sbr.rel (%p124) target = $region12
      $region11: #{tpu_custom_call.1} parent=5 // pred_region
        %s128 = ssub.s32 %s18, 1
      $region12: #{tpu_custom_call.1} parent=5 // pred_fallthru
        _
      %p129 = scmp.lt.s32.totalorder %s18, 2
      // Predicated region
      $region13: #{tpu_custom_call.1} parent=5 // pred_check
        %p130 = pneg %p129
      $region14: #{tpu_custom_call.1} parent=5 // pred_check_branch
        %132 = sbr.rel (%p130) target = $region16
      $region15: #{tpu_custom_call.1} parent=5 // pred_region
        // Predicated region
        $region17: #{tpu_custom_call.1} parent=15 // pred_check
          %p133 = pneg %p52
        $region18: #{tpu_custom_call.1} parent=15 // pred_check_branch
          %135 = sbr.rel (%p133) target = $region20
        $region19: #{tpu_custom_call.1} parent=15 // pred_region
          %s136 = sand.u32 %s42, 1
          %s137 = scalar_lea.sflag [#allocation3], %s136
          %s138 = sand.u32 %s42, 1
          %s139 = smul.addr %s138, 8
          %s140 = scalar_lea.vmem [#allocation2], %s139
          %s142 = ssub.s32 128, 128
          %143 = vsyncadd %s137, %s142
          %s144 = sadd.s32 %s26, %s25
          %s145 = smul.addr %s144, 128
          %s146 = scalar_lea.hbm %s0, %s145
          %s148 = sshll.u32 %s140, 4
          %s149 = int_to_ptr.vmem [resolvable:$true] %s148
          %151 = dma.hbm_to_vmem [thread:$0]  %s146, 128, %s149, %s137
        $region20: #{tpu_custom_call.1} parent=15 // pred_fallthru
          _
      $region16: #{tpu_custom_call.1} parent=5 // pred_fallthru
        _
      %p152 = scmp.le.s32.totalorder 1, %s18
      %p153 = scmp.lt.s32.totalorder %s18, 3
      %p154 = pnand %p152, %p153
      %p155 = pneg %p154
      // Predicated region
      $region21: #{tpu_custom_call.1} parent=5 // pred_check
        _
      $region22: #{tpu_custom_call.1} parent=5 // pred_check_branch
        %157 = sbr.rel (%p154) target = $region24
      $region23: #{tpu_custom_call.1} parent=5 // pred_region
        %s158 = ssub.s32 %s18, 1
        %s159 = sand.u32 %s45, 1
        %s160 = scalar_lea.sflag [#allocation3], %s159
        %s161 = sand.u32 %s45, 1
        %s162 = smul.addr %s161, 8
        %s163 = scalar_lea.vmem [#allocation2], %s162
        // Predicated region
        $region25: #{tpu_custom_call.1} parent=23 // pred_check
          %p164 = pneg %p58
        $region26: #{tpu_custom_call.1} parent=23 // pred_check_branch
          %166 = sbr.rel (%p164) target = $region28
        $region27: #{tpu_custom_call.1} parent=23 // pred_region
          %167 = dma.done %s160, 128
        $region28: #{tpu_custom_call.1} parent=23 // pred_fallthru
          _
        %s168 = sand.u32 %s45, 1
        %s169 = scalar_lea.sflag [#allocation3], %s168
        %s170 = sand.u32 %s45, 1
        %s171 = smul.addr %s170, 8
        %s172 = scalar_lea.vmem [#allocation2], %s171
        %p173 = pneg %p58
        %p174 = pneg %p55
        %p175 = pneg %p86
        %p176 = pneg %p83
        %s177 = sand.u32 %s73, 1
        %s178 = scalar_lea.sflag [#allocation4], %s177
        %s179 = sand.u32 %s73, 1
        %s180 = smul.addr %s179, 8
        %s181 = scalar_lea.vmem [#allocation5], %s180
        %p182 = pneg %p114
        %p183 = pneg %p111
        %s184 = sand.u32 %s101, 1
        %s185 = scalar_lea.sflag [#allocation7], %s184
        %s186 = sand.u32 %s101, 1
        %s187 = smul.addr %s186, 8
        %s188 = scalar_lea.vmem [#allocation6], %s187
        %v189 = vld [vmem:[%s163] sm:$0xff]
        %v190 = vlaneseq
        %v191 = vshrl.u32 %v190, 7
        %v192 = vsub.s32 0, %v191
        %v193 = vrot.slane %v189, %v192
        %v194 = vlaneseq
        %v195 = vshrl.u32 %v194, 7
        %v196 = vsub.s32 7, %v195
        %v197 = vrot.slane %v189, %v196
        %v199 = vrot.slane %v189, 6
        %vm201 = vcmask 1041408
        %v202 = vsel %vm201, %v193, %v199
        %v203 = vsel %vm201, %v199, %v197
        %vm206 = vcmask 1046528
        %v207 = vrot.slane %v202, 1
        %v208 = vrot.slane %v203, 1
        %v209 = vsel %vm206, %v207, %v208
        %v211 = vadd.f32 %v202, %v209
        %vm212 = vcmask 1045504
        %v213 = vrot.slane %v202, 2
        %v214 = vrot.slane %v203, 2
        %v215 = vsel %vm212, %v213, %v214
        %v217 = vadd.f32 %v211, %v215
        %vm218 = vcmask 1044480
        %v219 = vrot.slane %v202, 3
        %v220 = vrot.slane %v203, 3
        %v221 = vsel %vm218, %v219, %v220
        %v223 = vadd.f32 %v217, %v221
        %vm224 = vcmask 1043456
        %v225 = vrot.slane %v202, 4
        %v226 = vrot.slane %v203, 4
        %v227 = vsel %vm224, %v225, %v226
        %v229 = vadd.f32 %v223, %v227
        %v230 = vmul.f32 %v229, 0.2
        %231 = vst [vmem:[%s188] sm:$0xff] %v230
        %v232 = vsub.f32 %v189, %v230
        %233 = vst [vmem:[%s181] sm:$0xff] %v232
        %s234 = sand.u32 %s73, 1
        %s235 = scalar_lea.sflag [#allocation4], %s234
        %s236 = sand.u32 %s73, 1
        %s237 = smul.addr %s236, 8
        %s238 = scalar_lea.vmem [#allocation5], %s237
        %s239 = sand.u32 %s101, 1
        %s240 = scalar_lea.sflag [#allocation7], %s239
        %s241 = sand.u32 %s101, 1
        %s242 = smul.addr %s241, 8
        %s243 = scalar_lea.vmem [#allocation6], %s242
        // Predicated region
        $region29: #{tpu_custom_call.1} parent=23 // pred_check
          %p244 = pneg %p83
        $region30: #{tpu_custom_call.1} parent=23 // pred_check_branch
          %246 = sbr.rel (%p244) target = $region32
        $region31: #{tpu_custom_call.1} parent=23 // pred_region
          %s248 = ssub.s32 128, 128
          %249 = vsyncadd %s235, %s248
          %s250 = sadd.s32 %s28, %s27
          %s251 = smul.addr %s250, 128
          %s252 = scalar_lea.hbm %s1, %s251
          %s254 = sshll.u32 %s238, 4
          %s255 = int_to_ptr.vmem [resolvable:$true] %s254
          %257 = dma.vmem_to_hbm [thread:$0]  %s255, 128, %s252, %s235
        $region32: #{tpu_custom_call.1} parent=23 // pred_fallthru
          _
        // Predicated region
        $region33: #{tpu_custom_call.1} parent=23 // pred_check
          %p258 = pneg %p111
        $region34: #{tpu_custom_call.1} parent=23 // pred_check_branch
          %260 = sbr.rel (%p258) target = $region36
        $region35: #{tpu_custom_call.1} parent=23 // pred_region
          %s262 = ssub.s32 128, 128
          %263 = vsyncadd %s240, %s262
          %s264 = sadd.s32 %s28, %s27
          %s265 = smul.addr %s264, 128
          %s266 = scalar_lea.hbm %s2, %s265
          %s268 = sshll.u32 %s243, 4
          %s269 = int_to_ptr.vmem [resolvable:$true] %s268
          %271 = dma.vmem_to_hbm [thread:$0]  %s269, 128, %s266, %s240
        $region36: #{tpu_custom_call.1} parent=23 // pred_fallthru
          _
      $region24: #{tpu_custom_call.1} parent=5 // pred_fallthru
        _
      %p272 = scmp.le.s32.totalorder 2, %s18
      // Predicated region
      $region37: #{tpu_custom_call.1} parent=5 // pred_check
        %p273 = pneg %p272
      $region38: #{tpu_custom_call.1} parent=5 // pred_check_branch
        %275 = sbr.rel (%p273) target = $region40
      $region39: #{tpu_custom_call.1} parent=5 // pred_region
        %s276 = ssub.s32 %s18, 2
        // Predicated region
        $region41: #{tpu_custom_call.1} parent=39 // pred_check
          %p277 = pneg %p89
        $region42: #{tpu_custom_call.1} parent=39 // pred_check_branch
          %279 = sbr.rel (%p277) target = $region44
        $region43: #{tpu_custom_call.1} parent=39 // pred_region
          %s280 = sand.u32 %s74, 1
          %s281 = scalar_lea.sflag [#allocation4], %s280
          %s282 = sand.u32 %s74, 1
          %s283 = smul.addr %s282, 8
          %s284 = scalar_lea.vmem [#allocation5], %s283
          %285 = dma.done %s281, 128
        $region44: #{tpu_custom_call.1} parent=39 // pred_fallthru
          _
        // Predicated region
        $region45: #{tpu_custom_call.1} parent=39 // pred_check
          %p286 = pneg %p117
        $region46: #{tpu_custom_call.1} parent=39 // pred_check_branch
          %288 = sbr.rel (%p286) target = $region48
        $region47: #{tpu_custom_call.1} parent=39 // pred_region
          %s289 = sand.u32 %s102, 1
          %s290 = scalar_lea.sflag [#allocation7], %s289
          %s291 = sand.u32 %s102, 1
          %s292 = smul.addr %s291, 8
          %s293 = scalar_lea.vmem [#allocation6], %s292
          %294 = dma.done %s290, 128
        $region48: #{tpu_custom_call.1} parent=39 // pred_fallthru
          _
      $region40: #{tpu_custom_call.1} parent=5 // pred_fallthru
        _
    $region6: #{tpu_custom_call.1} parent=1 // loop_footer
      %s22 = sadd.s32 1, %s18
    $region7: #{tpu_custom_call.1} parent=1 // loop_footer_branch
      %17 = sbr.rel target = $region3
    $region8: #{tpu_custom_call.1} parent=1 // loop_exit
      _
    %295 = vsyncpa [#allocation3], 1
    %s296 = scalar_lea.sflag [#allocation3], 1
    %297 = vsyncpa %s296, 1
    %298 = vsyncpa [#allocation4], 1
    %s299 = scalar_lea.sflag [#allocation4], 1
    %300 = vsyncpa %s299, 1
    %301 = vsyncpa [#allocation7], 1
    %s302 = scalar_lea.sflag [#allocation7], 1
    %303 = vsyncpa %s302, 1

</llo_original>
